<compile_context>
chip_gen: v6e
topology: v6e:2x2x1
jax: 0.10.0
libtpu: 0.0.40
codegen_flags: <defaults>
</compile_context>

<pallas_src>
import jax
import jax.numpy as jnp
from jax import lax
from jax.experimental import pallas as pl
from jax.experimental.pallas import tpu as pltpu

LANES = 128
SUBLANES = 8
MAX_TILE_ROWS = 2048   # 2048 x 128 x 4 B = 1 MiB per input block


def _round_up(x: int, m: int) -> int:
    return ((x + m - 1) // m) * m


def _make_l1_partial_kernel(tile_rows: int, valid_rows: int, mask_tail: bool):
    """Builds a kernel emitting one (8, 128) partial sum of |sr - hr| per block."""

    def kernel(sr_ref, hr_ref, out_ref):
        diff = jnp.abs(
            sr_ref[...].astype(jnp.float32) - hr_ref[...].astype(jnp.float32)
        )
        if mask_tail:
            # Rows past `valid_rows` belong to the padded portion of the last
            # (partial) block; their contents are undefined -> zero them out.
            row0 = pl.program_id(0) * tile_rows
            rid = row0 + lax.broadcasted_iota(jnp.int32, (tile_rows, LANES), 0)
            diff = jnp.where(rid < valid_rows, diff, 0.0)
        # Lane/sublane-preserving partial sum (pure VPU): fold tile_rows -> 8
        # sublanes.  (tile_rows, 128) -> (tile_rows//8, 8, 128) keeps the last
        # two dims exactly one vreg tile, so the reshape is layout-free; the
        # axis-0 sum is a chain of cross-vreg VALU adds.  The single cross-lane
        # reduce happens later in the wrapper on a tiny array.
        out_ref[...] = diff.reshape(
            tile_rows // SUBLANES, SUBLANES, LANES
        ).sum(axis=0)

    return kernel


def pixel_loss(sr: jax.Array, hr: jax.Array) -> jax.Array:
    """L1 loss (mean of |sr - hr|), matching torch.nn.L1Loss() semantics."""
    assert sr.shape == hr.shape, "sr and hr must have identical shapes"
    n_elem = sr.size

    sr_flat = sr.reshape(-1)
    hr_flat = hr.reshape(-1)

    # Lane-dense slab.  When numel % 128 == 0 this is a free reshape (no extra
    # HBM traffic).  Otherwise pad only the <128-element tail with zeros
    # (|0 - 0| = 0, so the sum is unchanged; we divide by the true n_elem).
    rem = n_elem % LANES
    if rem != 0:
        pad = LANES - rem
        sr_flat = jnp.pad(sr_flat, (0, pad))
        hr_flat = jnp.pad(hr_flat, (0, pad))
    rows = sr_flat.size // LANES
    sr2d = sr_flat.reshape(rows, LANES)
    hr2d = hr_flat.reshape(rows, LANES)

    tile_rows = min(MAX_TILE_ROWS, _round_up(rows, SUBLANES))
    n_blocks = pl.cdiv(rows, tile_rows)
    mask_tail = (rows % tile_rows) != 0  # static: masking compiled only if needed

    kernel = _make_l1_partial_kernel(tile_rows, rows, mask_tail)

    partials = pl.pallas_call(
        kernel,
        out_shape=jax.ShapeDtypeStruct((n_blocks, SUBLANES, LANES), jnp.float32),
        grid=(n_blocks,),
        in_specs=[
            pl.BlockSpec((tile_rows, LANES), lambda i: (i, 0)),
            pl.BlockSpec((tile_rows, LANES), lambda i: (i, 0)),
        ],
        out_specs=pl.BlockSpec((None, SUBLANES, LANES), lambda i: (i, 0, 0)),
        compiler_params=pltpu.CompilerParams(
            dimension_semantics=("parallel",),  # megacore split on v7x
        ),
    )(sr2d, hr2d)

    # Final cross-lane / cross-block reduce + mean in plain JAX (negligible:
    # n_blocks x 8 x 128 f32 elements).
    return (jnp.sum(partials) / jnp.float32(n_elem)).astype(jnp.float32)


if __name__ == "__main__":
    key = jax.random.PRNGKey(0)
    k_sr, k_hr = jax.random.split(key)
    # NCHW images: batch=2, channels=4, spatial=16x16
    sr = jax.random.normal(k_sr, (2, 4, 16, 16), dtype=jnp.float32)
    hr = jax.random.normal(k_hr, (2, 4, 16, 16), dtype=jnp.float32)

    loss = pixel_loss(sr, hr)
    jax.block_until_ready(loss)

    # sanity check against plain-JAX reference
    ref = jnp.mean(jnp.abs(sr - hr))
    assert jnp.allclose(loss, ref, rtol=1e-5, atol=1e-6), (loss, ref)

    print("KERNEL_OK")
</pallas_src>

<mosaic_0001>
module attributes {stable_mosaic.version = 11 : i64} {
  func.func @kernel(%arg0: i32, %arg1: memref<16x128xf32, #tpu.memory_space<vmem>>, %arg2: memref<16x128xf32, #tpu.memory_space<vmem>>, %arg3: memref<1x8x128xf32, #tpu.memory_space<vmem>>) attributes {dimension_semantics = [#tpu.dimension_semantics<parallel>], iteration_bounds = array<i64: 1>, scalar_prefetch = 0 : i64, scratch_operands = 0 : i64, tpu.core_type = #tpu.core_type<tc>, window_params = [{transform_indices = @transform_0, window_bounds = array<i64: 16, 128>}, {transform_indices = @transform_1, window_bounds = array<i64: 16, 128>}, {transform_indices = @transform_2, window_bounds = array<i64: 1, 8, 128>}]} {
    %c0 = arith.constant 0 : index
    %c0_0 = arith.constant 0 : index
    %0 = vector.load %arg1[%c0, %c0_0] : memref<16x128xf32, #tpu.memory_space<vmem>>, vector<16x128xf32>
    %c0_1 = arith.constant 0 : index
    %c0_2 = arith.constant 0 : index
    %1 = vector.load %arg2[%c0_1, %c0_2] : memref<16x128xf32, #tpu.memory_space<vmem>>, vector<16x128xf32>
    %2 = arith.subf %0, %1 : vector<16x128xf32>
    %3 = math.absf %2 : vector<16x128xf32>
    %4 = vector.shape_cast %3 : vector<16x128xf32> to vector<2x8x128xf32>
    %cst = arith.constant dense<0.000000e+00> : vector<8x128xf32>
    %5 = vector.multi_reduction <add>, %4, %cst [0] : vector<2x8x128xf32> to vector<8x128xf32>
    %c0_3 = arith.constant 0 : index
    %c0_4 = arith.constant 0 : index
    %c0_5 = arith.constant 0 : index
    %6 = vector.load %arg3[%c0_3, %c0_4, %c0_5] : memref<1x8x128xf32, #tpu.memory_space<vmem>>, vector<1x8x128xf32>
    %7 = vector.shape_cast %6 : vector<1x8x128xf32> to vector<8x128xf32>
    %8 = vector.shape_cast %5 : vector<8x128xf32> to vector<1x8x128xf32>
    tpu.vector_store %arg3[%c0_3, %c0_4, %c0_5], %8 {strides = array<i32>} : memref<1x8x128xf32, #tpu.memory_space<vmem>>, vector<1x8x128xf32>,
    return
  }
  func.func @transform_0(%arg0: i32) -> (i32, i32) {
    %c0_i32 = arith.constant 0 : i32
    %c0_i32_0 = arith.constant 0 : i32
    return %arg0, %c0_i32 : i32, i32
  }
  func.func @transform_1(%arg0: i32) -> (i32, i32) {
    %c0_i32 = arith.constant 0 : i32
    %c0_i32_0 = arith.constant 0 : i32
    return %arg0, %c0_i32 : i32, i32
  }
  func.func @transform_2(%arg0: i32) -> (i32, i32, i32) {
    %c0_i32 = arith.constant 0 : i32
    %c0_i32_0 = arith.constant 0 : i32
    %c0_i32_1 = arith.constant 0 : i32
    return %arg0, %c0_i32, %c0_i32_0 : i32, i32, i32
  }
}

</mosaic_0001>

<llo_original>
// kernel: tpu_custom_call.1
$region0: #{tpu_custom_call.1}
  #allocation0 [shape = 'u32[]', space=smem, size = 0x4, offset = 0x4, fixed_abs, tag = 'smem constant byte address 0x4 - core index']
  #allocation1 [shape = 'u32[144,128]{1,0:T(1,128)}', space=vmem, size = 0x12000, scoped, tag = 'internal scratch']
  %s0 = inlined_call_operand.hbm [shape: f32[16,128], index: 0, kind: input, shape index: {}]
  %s1 = inlined_call_operand.hbm [shape: f32[16,128], index: 1, kind: input, shape index: {}]
  %s2 = inlined_call_operand.hbm [shape: f32[1,8,128], index: 2, kind: output, shape index: {}]
  %s3 = sld [smem:[#allocation0]]
  $region26: #{tpu_custom_call.1} parent=0
    _
  %s5 = ssub.s32 1, %s3
  %s6 = scalar_select 0, %s5, %s3
  $region1: #{tpu_custom_call.1} parent=0
    #allocation2 [shape = 'u8[8192]{0}', space=vmem, size = 0x2000, scoped, tag = 'input window, operand 0, single buffered']
    #allocation3 [shape = 's32[1]{0}', space=sflag, size = 0x4, scoped, tag = 'scoped memory for tpu_custom_call.1']
    #allocation4 [shape = 's32[1]{0}', space=sflag, size = 0x4, scoped, tag = 'scoped memory for tpu_custom_call.1']
    #allocation5 [shape = 'u8[8192]{0}', space=vmem, size = 0x2000, scoped, tag = 'input window, operand 1, single buffered']
    #allocation6 [shape = 's32[1]{0}', space=sflag, size = 0x4, scoped, tag = 'scoped memory for tpu_custom_call.1']
    #allocation7 [shape = 'u8[4096]{0}', space=vmem, size = 0x1000, scoped, tag = 'output window, operand 0, single buffered']
    %7 = vsyncpa [#allocation3], 0
    %8 = vsyncpa [#allocation6], 0
    %9 = vsyncpa [#allocation4], 0
    // Predicated region
    $region2: #{tpu_custom_call.1} parent=1 // pred_check
      _
    $region3: #{tpu_custom_call.1} parent=1 // pred_check_branch
      %11 = sbr.rel (0) target = $region5
    $region4: #{tpu_custom_call.1} parent=1 // pred_region
      %s13 = ssub.s32 256, 256
      %14 = vsyncadd [#allocation3], %s13
      %s15 = sshll.u32 [#allocation2], 4
      %s16 = int_to_ptr.vmem [resolvable:$true] %s15
      %21 = dma.hbm_to_vmem [thread:$0]  %s0, 256, %s16, [#allocation3], 128, 128, 8
    $region5: #{tpu_custom_call.1} parent=1 // pred_fallthru
      _
    // Predicated region
    $region6: #{tpu_custom_call.1} parent=1 // pred_check
      _
    $region7: #{tpu_custom_call.1} parent=1 // pred_check_branch
      %23 = sbr.rel (0) target = $region9
    $region8: #{tpu_custom_call.1} parent=1 // pred_region
      %s25 = ssub.s32 256, 256
      %26 = vsyncadd [#allocation6], %s25
      %s27 = sshll.u32 [#allocation5], 4
      %s28 = int_to_ptr.vmem [resolvable:$true] %s27
      %33 = dma.hbm_to_vmem [thread:$0]  %s1, 256, %s28, [#allocation6], 128, 128, 8
    $region9: #{tpu_custom_call.1} parent=1 // pred_fallthru
      _
    // Predicated region
    $region10: #{tpu_custom_call.1} parent=1 // pred_check
      _
    $region11: #{tpu_custom_call.1} parent=1 // pred_check_branch
      %35 = sbr.rel (0) target = $region13
    $region12: #{tpu_custom_call.1} parent=1 // pred_region
      %36 = dma.done [#allocation3], 256
    $region13: #{tpu_custom_call.1} parent=1 // pred_fallthru
      _
    // Predicated region
    $region14: #{tpu_custom_call.1} parent=1 // pred_check
      _
    $region15: #{tpu_custom_call.1} parent=1 // pred_check_branch
      %38 = sbr.rel (0) target = $region17
    $region16: #{tpu_custom_call.1} parent=1 // pred_region
      %39 = dma.done [#allocation6], 256
    $region17: #{tpu_custom_call.1} parent=1 // pred_fallthru
      _
    %v40 = vld [vmem:[#allocation2] sm:$0xff]
    %v41 = vld [vmem:[#allocation2 + $0x8] sm:$0xff]
    %v42 = vld [vmem:[#allocation5] sm:$0xff]
    %v43 = vld [vmem:[#allocation5 + $0x8] sm:$0xff]
    %v44 = vsub.f32 %v40, %v42
    %v45 = vsub.f32 %v41, %v43
    %v46 = vand.u32 2147483647, %v44
    %v47 = vand.u32 2147483647, %v45
    %v48 = vadd.f32 %v46, %v47
    %49 = vst [vmem:[#allocation7] sm:$0xff] %v48
    // Predicated region
    $region18: #{tpu_custom_call.1} parent=1 // pred_check
      _
    $region19: #{tpu_custom_call.1} parent=1 // pred_check_branch
      %51 = sbr.rel (0) target = $region21
    $region20: #{tpu_custom_call.1} parent=1 // pred_region
      %s53 = ssub.s32 128, 128
      %54 = vsyncadd [#allocation4], %s53
      %s56 = sshll.u32 [#allocation7], 4
      %s57 = int_to_ptr.vmem [resolvable:$true] %s56
      %59 = dma.vmem_to_hbm [thread:$0]  %s57, 128, %s2, [#allocation4]
    $region21: #{tpu_custom_call.1} parent=1 // pred_fallthru
      _
    // Predicated region
    $region22: #{tpu_custom_call.1} parent=1 // pred_check
      _
    $region23: #{tpu_custom_call.1} parent=1 // pred_check_branch
      %61 = sbr.rel (0) target = $region25
    $region24: #{tpu_custom_call.1} parent=1 // pred_region
      %62 = dma.done [#allocation4], 128
    $region25: #{tpu_custom_call.1} parent=1 // pred_fallthru
      _
    %63 = vsyncpa [#allocation3], 1
    %64 = vsyncpa [#allocation6], 1
    %65 = vsyncpa [#allocation4], 1

</llo_original>
